<compile_context>
chip_gen: v6e
topology: v6e:2x2x1
jax: 0.10.0
libtpu: 0.0.40
codegen_flags: <defaults>
</compile_context>

<pallas_src>
import functools

import jax
import jax.numpy as jnp
from jax.experimental import pallas as pl
from jax.experimental.pallas import tpu as pltpu


def _round_up(x, m):
    return (x + m - 1) // m * m


# ---------------------------------------------------------------------------
# Kernel 1: fused global average + max pooling over the spatial axis.
# ---------------------------------------------------------------------------
def _pool_kernel(x_ref, avg_ref, max_ref, sum_acc, max_acc, *,
                 tile_s, inv_s, n_spatial_blocks, tail_cols):
    j = pl.program_id(1)
    tr = sum_acc.shape[0]
    neg_inf = jnp.float32(-jnp.inf)

    @pl.when(j == 0)
    def _init():
        sum_acc[...] = jnp.zeros(sum_acc.shape, sum_acc.dtype)
        max_acc[...] = jnp.full(max_acc.shape, neg_inf, max_acc.dtype)

    def fold(n_full, n_partial):
        # Accumulate 128-lane chunks into register-resident partials, then
        # fold into the VMEM scratch once per grid step.
        psum = jnp.zeros((tr, 128), jnp.float32)
        pmax = jnp.full((tr, 128), neg_inf, jnp.float32)
        for c in range(n_full):
            chunk = x_ref[:, pl.ds(c * 128, 128)].astype(jnp.float32)
            psum = psum + chunk
            pmax = jnp.maximum(pmax, chunk)
        if n_partial:
            chunk = x_ref[:, pl.ds(n_full * 128, 128)].astype(jnp.float32)
            lane = jax.lax.broadcasted_iota(jnp.int32, (tr, 128), 1)
            valid = lane < n_partial
            psum = psum + jnp.where(valid, chunk, 0.0)
            pmax = jnp.maximum(pmax, jnp.where(valid, chunk, neg_inf))
        sum_acc[...] = sum_acc[...] + psum
        max_acc[...] = jnp.maximum(max_acc[...], pmax)

    if n_spatial_blocks > 1:
        # Interior spatial blocks: fully valid, mask-free hot path.
        @pl.when(j != n_spatial_blocks - 1)
        def _interior():
            fold(tile_s // 128, 0)

    @pl.when(j == n_spatial_blocks - 1)
    def _tail_and_finalize():
        # Last spatial block: only the valid chunks, mask only the ragged one.
        fold(tail_cols // 128, tail_cols % 128)
        # Cross-lane reduce + scale happen once per row block.
        avg_ref[...] = (jnp.sum(sum_acc[...], axis=-1, keepdims=True)
                        * inv_s).astype(avg_ref.dtype)
        max_ref[...] = jnp.max(max_acc[...], axis=-1,
                               keepdims=True).astype(max_ref.dtype)


def _global_avg_max_pool(x2, *, tile_rows, tile_s):
    rows, S = x2.shape
    itemsize = jnp.dtype(x2.dtype).itemsize
    sublane = {4: 8, 2: 16, 1: 32}.get(itemsize, 8)

    # Spatial tile: multiple of 128, no larger than needed.
    ts = min(tile_s, _round_up(S, 128))
    ts = _round_up(ts, 128)
    # Row tile: dtype-aware sublane multiple; aim for >=2 row blocks so the
    # "parallel" axis can shard across TensorCores (v7x megacore).
    tr = min(tile_rows, _round_up(pl.cdiv(rows, 2), sublane))
    tr = _round_up(max(tr, sublane), sublane)

    n_row_blocks = pl.cdiv(rows, tr)
    n_spatial_blocks = pl.cdiv(S, ts)
    tail_cols = S - (n_spatial_blocks - 1) * ts          # in (0, ts]

    block_bytes = tr * ts * itemsize
    vmem_limit = int(min(100 * 2**20,
                         max(16 * 2**20, 2 * block_bytes + 4 * 2**20)))

    kernel = functools.partial(
        _pool_kernel, tile_s=ts, inv_s=1.0 / S,
        n_spatial_blocks=n_spatial_blocks, tail_cols=tail_cols)

    avg, mx = pl.pallas_call(
        kernel,
        out_shape=(
            jax.ShapeDtypeStruct((rows, 1), jnp.float32),
            jax.ShapeDtypeStruct((rows, 1), jnp.float32),
        ),
        grid=(n_row_blocks, n_spatial_blocks),
        in_specs=[pl.BlockSpec((tr, ts), lambda i, j: (i, j))],
        out_specs=(
            pl.BlockSpec((tr, 1), lambda i, j: (i, 0)),
            pl.BlockSpec((tr, 1), lambda i, j: (i, 0)),
        ),
        scratch_shapes=[
            pltpu.VMEM((tr, 128), jnp.float32),   # per-lane sum partials
            pltpu.VMEM((tr, 128), jnp.float32),   # per-lane max partials
        ],
        compiler_params=pltpu.CompilerParams(
            dimension_semantics=("parallel", "arbitrary"),
            vmem_limit_bytes=vmem_limit,
        ),
        cost_estimate=pl.CostEstimate(
            flops=2 * rows * S,
            transcendentals=0,
            bytes_accessed=rows * S * itemsize + 2 * rows * 4),
    )(x2)
    return avg, mx


# ---------------------------------------------------------------------------
# Kernel 2: shared MLP (1x1 convs) + sigmoid on stacked [avg; max] vectors.
# ---------------------------------------------------------------------------
def _mlp_kernel(p_ref, w1t_ref, w2t_ref, o_ref, *, b):
    p = p_ref[...].astype(jnp.float32)                        # (2B, C)
    h = jnp.dot(p, w1t_ref[...].astype(jnp.float32),
                preferred_element_type=jnp.float32)           # (2B, Cr_p)
    h = jnp.maximum(h, 0.0)
    y = jnp.dot(h, w2t_ref[...].astype(jnp.float32),
                preferred_element_type=jnp.float32)           # (2B, C)
    z = y[:b, :] + y[b:, :]                                   # (B, C)
    o_ref[...] = (1.0 / (1.0 + jnp.exp(-z))).astype(o_ref.dtype)


def channel_attention(x, w1, w2, *, tile_rows=128, tile_s=8192):
    """ChannelAttentionModule forward.

    x  : (B, C, H, W)
    w1 : (C // ratio, C)   first 1x1 conv weight (bias=False)
    w2 : (C, C // ratio)   second 1x1 conv weight (bias=False)
    returns (B, C, 1, 1) attention weights in x.dtype.
    """
    B, C, H, W = x.shape
    S = H * W
    rows = B * C
    x2 = x.reshape(rows, S)                                   # free reshape, no pad

    avg, mx = _global_avg_max_pool(x2, tile_rows=tile_rows, tile_s=tile_s)

    # Stack avg and max along the row axis: one MLP pass instead of two.
    pooled = jnp.concatenate(
        [avg.reshape(B, C), mx.reshape(B, C)], axis=0)        # (2B, C)

    # Zero-pad the MLP bottleneck dim up to a multiple of 128 for lane-dense
    # MXU operands; ReLU(0)=0 and zero rows in w2 keep this exact.
    Cr = w1.shape[0]
    cr_p = _round_up(Cr, 128)
    w1t = jnp.pad(jnp.transpose(w1), ((0, 0), (0, cr_p - Cr)))   # (C, cr_p)
    w2t = jnp.pad(jnp.transpose(w2), ((0, cr_p - Cr), (0, 0)))   # (cr_p, C)

    out = pl.pallas_call(
        functools.partial(_mlp_kernel, b=B),
        out_shape=jax.ShapeDtypeStruct((B, C), x.dtype),
        grid=(1,),
        in_specs=[
            pl.BlockSpec((2 * B, C), lambda i: (0, 0)),
            pl.BlockSpec((C, cr_p), lambda i: (0, 0)),
            pl.BlockSpec((cr_p, C), lambda i: (0, 0)),
        ],
        out_specs=pl.BlockSpec((B, C), lambda i: (0, 0)),
    )(pooled, w1t, w2t)

    return out.reshape(B, C, 1, 1)


if __name__ == "__main__":
    key = jax.random.PRNGKey(0)
    k_x, k_w1, k_w2 = jax.random.split(key, 3)

    batch, channels, height, width = 2, 64, 16, 16      # embed_dim=64, ratio=16
    ratio = 16
    hidden = channels // ratio                            # 4

    x = jax.random.normal(k_x, (batch, channels, height, width), dtype=jnp.float32)
    w1 = jax.random.normal(k_w1, (hidden, channels), dtype=jnp.float32) * (1.0 / jnp.sqrt(channels))
    w2 = jax.random.normal(k_w2, (channels, hidden), dtype=jnp.float32) * (1.0 / jnp.sqrt(hidden))

    out = channel_attention(x, w1, w2)
    out = jax.block_until_ready(out)

    # Pure-JAX reference (same math as the torch forward).
    avg_p = jnp.mean(x, axis=(2, 3))                      # (B, C)
    max_p = jnp.max(x, axis=(2, 3))                       # (B, C)

    def mlp_ref(v):
        h = jnp.maximum(jnp.dot(v, w1.T, precision="highest"), 0.0)
        return jnp.dot(h, w2.T, precision="highest")

    ref = jax.nn.sigmoid(mlp_ref(avg_p) + mlp_ref(max_p)).reshape(batch, channels, 1, 1)

    assert out.shape == (batch, channels, 1, 1), f"bad shape {out.shape}"
    assert jnp.allclose(out, ref, atol=2e-3, rtol=2e-3), "mismatch vs reference"

    print("KERNEL_OK")
</pallas_src>

<mosaic_0001>
module attributes {stable_mosaic.version = 11 : i64} {
  func.func @_pool_kernel(%arg0: i32, %arg1: i32, %arg2: memref<64x256xf32, #tpu.memory_space<vmem>>, %arg3: memref<64x1xf32, #tpu.memory_space<vmem>>, %arg4: memref<64x1xf32, #tpu.memory_space<vmem>>, %arg5: memref<64x128xf32, #tpu.memory_space<vmem>>, %arg6: memref<64x128xf32, #tpu.memory_space<vmem>>) attributes {dimension_semantics = [#tpu.dimension_semantics<parallel>, #tpu.dimension_semantics<arbitrary>], iteration_bounds = array<i64: 2, 1>, scalar_prefetch = 0 : i64, scratch_operands = 2 : i64, tpu.core_type = #tpu.core_type<tc>, window_params = [{transform_indices = @transform_0, window_bounds = array<i64: 64, 256>}, {transform_indices = @transform_1, window_bounds = array<i64: 64, 1>}, {transform_indices = @transform_2, window_bounds = array<i64: 64, 1>}]} {
    %c0_i32 = arith.constant 0 : i32
    %0 = arith.cmpi eq, %arg1, %c0_i32 : i32
    %1 = arith.extui %0 : i1 to i32
    %cst = arith.constant 0xFF800000 : f32
    %c0_i32_0 = arith.constant 0 : i32
    %2 = arith.cmpi ne, %1, %c0_i32_0 : i32
    scf.if %2 {
      %cst_4 = arith.constant 0.000000e+00 : f32
      %6 = vector.broadcast %cst_4 : f32 to vector<64x128xf32>
      %c0 = arith.constant 0 : index
      %c0_5 = arith.constant 0 : index
      %7 = vector.load %arg5[%c0, %c0_5] : memref<64x128xf32, #tpu.memory_space<vmem>>, vector<64x128xf32>
      tpu.vector_store %arg5[%c0, %c0_5], %6 {strides = array<i32>} : memref<64x128xf32, #tpu.memory_space<vmem>>, vector<64x128xf32>,
      %8 = vector.broadcast %cst : f32 to vector<64x128xf32>
      %c0_6 = arith.constant 0 : index
      %c0_7 = arith.constant 0 : index
      %9 = vector.load %arg6[%c0_6, %c0_7] : memref<64x128xf32, #tpu.memory_space<vmem>>, vector<64x128xf32>
      tpu.vector_store %arg6[%c0_6, %c0_7], %8 {strides = array<i32>} : memref<64x128xf32, #tpu.memory_space<vmem>>, vector<64x128xf32>,
    } else {
    }
    %c0_i32_1 = arith.constant 0 : i32
    %3 = arith.cmpi eq, %arg1, %c0_i32_1 : i32
    %4 = arith.extui %3 : i1 to i32
    %cst_2 = arith.constant 0xFF800000 : f32
    %c0_i32_3 = arith.constant 0 : i32
    %5 = arith.cmpi ne, %4, %c0_i32_3 : i32
    scf.if %5 {
      %cst_4 = arith.constant 0.000000e+00 : f32
      %6 = vector.broadcast %cst_4 : f32 to vector<64x128xf32>
      %7 = vector.broadcast %cst_2 : f32 to vector<64x128xf32>
      %c0 = arith.constant 0 : index
      %c0_5 = arith.constant 0 : index
      %8 = vector.load %arg2[%c0, %c0_5] : memref<64x256xf32, #tpu.memory_space<vmem>>, vector<64x128xf32>
      %9 = arith.addf %6, %8 : vector<64x128xf32>
      %10 = arith.maximumf %7, %8 : vector<64x128xf32>
      %c0_6 = arith.constant 0 : index
      %c128 = arith.constant 128 : index
      %11 = vector.load %arg2[%c0_6, %c128] : memref<64x256xf32, #tpu.memory_space<vmem>>, vector<64x128xf32>
      %12 = arith.addf %9, %11 : vector<64x128xf32>
      %13 = arith.maximumf %10, %11 : vector<64x128xf32>
      %c0_7 = arith.constant 0 : index
      %c0_8 = arith.constant 0 : index
      %14 = vector.load %arg5[%c0_7, %c0_8] : memref<64x128xf32, #tpu.memory_space<vmem>>, vector<64x128xf32>
      %15 = arith.addf %14, %12 : vector<64x128xf32>
      %c0_9 = arith.constant 0 : index
      %c0_10 = arith.constant 0 : index
      %16 = vector.load %arg5[%c0_9, %c0_10] : memref<64x128xf32, #tpu.memory_space<vmem>>, vector<64x128xf32>
      tpu.vector_store %arg5[%c0_9, %c0_10], %15 {strides = array<i32>} : memref<64x128xf32, #tpu.memory_space<vmem>>, vector<64x128xf32>,
      %c0_11 = arith.constant 0 : index
      %c0_12 = arith.constant 0 : index
      %17 = vector.load %arg6[%c0_11, %c0_12] : memref<64x128xf32, #tpu.memory_space<vmem>>, vector<64x128xf32>
      %18 = arith.maximumf %17, %13 : vector<64x128xf32>
      %c0_13 = arith.constant 0 : index
      %c0_14 = arith.constant 0 : index
      %19 = vector.load %arg6[%c0_13, %c0_14] : memref<64x128xf32, #tpu.memory_space<vmem>>, vector<64x128xf32>
      tpu.vector_store %arg6[%c0_13, %c0_14], %18 {strides = array<i32>} : memref<64x128xf32, #tpu.memory_space<vmem>>, vector<64x128xf32>,
      %c0_15 = arith.constant 0 : index
      %c0_16 = arith.constant 0 : index
      %20 = vector.load %arg5[%c0_15, %c0_16] : memref<64x128xf32, #tpu.memory_space<vmem>>, vector<64x128xf32>
      %cst_17 = arith.constant dense<0.000000e+00> : vector<64xf32>
      %21 = vector.multi_reduction <add>, %20, %cst_17 [1] : vector<64x128xf32> to vector<64xf32>
      %22 = vector.shape_cast %21 : vector<64xf32> to vector<64x1xf32>
      %cst_18 = arith.constant 3.906250e-03 : f32
      %23 = vector.broadcast %cst_18 : f32 to vector<64x1xf32>
      %24 = arith.mulf %22, %23 : vector<64x1xf32>
      %c0_19 = arith.constant 0 : index
      %c0_20 = arith.constant 0 : index
      %25 = vector.load %arg3[%c0_19, %c0_20] : memref<64x1xf32, #tpu.memory_space<vmem>>, vector<64x1xf32>
      tpu.vector_store %arg3[%c0_19, %c0_20], %24 {strides = array<i32>} : memref<64x1xf32, #tpu.memory_space<vmem>>, vector<64x1xf32>,
      %c0_21 = arith.constant 0 : index
      %c0_22 = arith.constant 0 : index
      %26 = vector.load %arg6[%c0_21, %c0_22] : memref<64x128xf32, #tpu.memory_space<vmem>>, vector<64x128xf32>
      %cst_23 = arith.constant dense<0xFF800000> : vector<64xf32>
      %27 = vector.multi_reduction <maximumf>, %26, %cst_23 [1] : vector<64x128xf32> to vector<64xf32>
      %28 = vector.shape_cast %27 : vector<64xf32> to vector<64x1xf32>
      %c0_24 = arith.constant 0 : index
      %c0_25 = arith.constant 0 : index
      %29 = vector.load %arg4[%c0_24, %c0_25] : memref<64x1xf32, #tpu.memory_space<vmem>>, vector<64x1xf32>
      tpu.vector_store %arg4[%c0_24, %c0_25], %28 {strides = array<i32>} : memref<64x1xf32, #tpu.memory_space<vmem>>, vector<64x1xf32>,
    } else {
    }
    return
  }
  func.func @transform_0(%arg0: i32, %arg1: i32) -> (i32, i32) {
    %c0_i32 = arith.constant 0 : i32
    return %arg0, %arg1 : i32, i32
  }
  func.func @transform_1(%arg0: i32, %arg1: i32) -> (i32, i32) {
    %c0_i32 = arith.constant 0 : i32
    %c0_i32_0 = arith.constant 0 : i32
    return %arg0, %c0_i32 : i32, i32
  }
  func.func @transform_2(%arg0: i32, %arg1: i32) -> (i32, i32) {
    %c0_i32 = arith.constant 0 : i32
    %c0_i32_0 = arith.constant 0 : i32
    return %arg0, %c0_i32 : i32, i32
  }
}

</mosaic_0001>

<llo_original>
// kernel: tpu_custom_call.1
$region0: #{tpu_custom_call.1}
  #allocation0 [shape = 'u32[]', space=smem, size = 0x4, offset = 0x4, fixed_abs, tag = 'smem constant byte address 0x4 - core index']
  #allocation1 [shape = 'u32[144,128]{1,0:T(1,128)}', space=vmem, size = 0x12000, scoped, tag = 'internal scratch']
  #allocation2 [shape = 'f32[64,128]{1,0:T(8,128)}', space=vmem, size = 0x8000, scoped, tag = 'scratch operand']
  #allocation3 [shape = 'f32[64,128]{1,0:T(8,128)}', space=vmem, size = 0x8000, scoped, tag = 'scratch operand']
  %s0 = inlined_call_operand.hbm [shape: f32[128,256], index: 0, kind: input, shape index: {}]
  %s1 = inlined_call_operand.vmem [shape: f32[128,1], index: 1, kind: output, shape index: {0}]
  %s2 = inlined_call_operand.vmem [shape: f32[128,1], index: 2, kind: output, shape index: {1}]
  %3 = xla_tuple %s1, %s2
  %s4 = sld [smem:[#allocation0]]
  $region53: #{tpu_custom_call.1} parent=0
    _
  %s6 = ssub.s32 1, %s4
  %s7 = scalar_select 0, %s6, %s4
  $region1: #{tpu_custom_call.1} parent=0
    #allocation4 [shape = 'u8[131072]{0}', space=vmem, size = 0x20000, scoped, tag = 'input window, operand 0']
    #allocation5 [shape = 's32[2]{0}', space=sflag, size = 0x8, scoped, tag = 'scoped memory for tpu_custom_call.1']
    %8 = vsyncpa [#allocation5], 0
    %s9 = scalar_lea.sflag [#allocation5], 1
    %10 = vsyncpa %s9, 0
    loop: start=0, step=1, limit=4
    $region2: #{tpu_custom_call.1} parent=1 // loop_pre_header
      _
    $region3: #{tpu_custom_call.1} parent=1 // loop_header
      %s12 = sphi 0, %s16
      %p13 = scmp.ge.s32.totalorder %s12, 4
      %s19 = sphi 0, %s31
      %s20 = sphi 0, %s27
      %s21 = sphi 0, %s19
      %s22 = sphi 0, %s20
      %s23 = sphi 0, %s21
      %s24 = sphi 0, %s22
      %s36 = sphi 0, %s38
      %s39 = sphi 0, %s36
      %s40 = sphi 0, %s39
      %s56 = sphi 0, %s40
      %s62 = sphi 0, %s64
      %s65 = sphi 0, %s62
      %s66 = sphi 0, %s65
      %s82 = sphi 0, %s66
      %s88 = sphi 0, %s90
      %s91 = sphi 0, %s88
      %s92 = sphi 0, %s91
      %s108 = sphi 0, %s92
    $region4: #{tpu_custom_call.1} parent=1 // loop_header_branch
      %15 = sbr.rel (%p13) target = $region8
    $region5: #{tpu_custom_call.1} parent=1 // loop_body
      %s17 = ssub.s32 %s12, 1
      %s18 = ssub.s32 %s12, 2
      %s25 = sadd.s32 1, %s20
      %p26 = scmp.ge.s32.totalorder %s25, 1
      %s27 = scalar_select %p26, 0, %s25
      %s28 = sadd.s32 1, %s19
      %s29 = scalar_select %p26, %s28, %s19
      %p30 = scmp.ge.s32.totalorder %s29, 2
      %s31 = scalar_select %p30, 0, %s29
      %s32 = ssub.s32 %s19, %s31
      %s33 = ssub.s32 %s20, %s27
      %s34 = sor.u32 %s32, %s33
      %p35 = scmp.eq.s32.totalorder %s34, 0
      %s37 = sadd.s32 %s36, 1
      %s38 = scalar_select %p35, %s36, %s37
      %p41 = pneg %p35
      %p42 = scmp.eq.s32.totalorder %s12, 1
      %p43 = por %p41, %p42
      %p44 = scmp.ne.s32.totalorder %s36, %s39
      %p45 = scmp.eq.s32.totalorder %s12, 0
      %p46 = por %p44, %p45
      %p47 = scmp.ne.s32.totalorder %s36, %s39
      %p48 = scmp.eq.s32.totalorder %s17, 1
      %p49 = por %p47, %p48
      %p50 = scmp.ne.s32.totalorder %s39, %s40
      %p51 = scmp.eq.s32.totalorder %s17, 0
      %p52 = por %p50, %p51
      %p53 = scmp.ne.s32.totalorder %s39, %s40
      %p54 = scmp.eq.s32.totalorder %s18, 1
      %p55 = por %p53, %p54
      %p57 = scmp.ne.s32.totalorder %s40, %s56
      %p58 = scmp.eq.s32.totalorder %s18, 0
      %p59 = por %p57, %p58
      %s60 = ssub.s32 %s19, %s31
      %p61 = scmp.eq.s32.totalorder %s60, 0
      %s63 = sadd.s32 %s62, 1
      %s64 = scalar_select %p61, %s62, %s63
      %p67 = pneg %p61
      %p68 = scmp.eq.s32.totalorder %s12, 1
      %p69 = por %p67, %p68
      %p70 = scmp.ne.s32.totalorder %s62, %s65
      %p71 = scmp.eq.s32.totalorder %s12, 0
      %p72 = por %p70, %p71
      %p73 = scmp.ne.s32.totalorder %s62, %s65
      %p74 = scmp.eq.s32.totalorder %s17, 1
      %p75 = por %p73, %p74
      %p76 = scmp.ne.s32.totalorder %s65, %s66
      %p77 = scmp.eq.s32.totalorder %s17, 0
      %p78 = por %p76, %p77
      %p79 = scmp.ne.s32.totalorder %s65, %s66
      %p80 = scmp.eq.s32.totalorder %s18, 1
      %p81 = por %p79, %p80
      %p83 = scmp.ne.s32.totalorder %s66, %s82
      %p84 = scmp.eq.s32.totalorder %s18, 0
      %p85 = por %p83, %p84
      %s86 = ssub.s32 %s19, %s31
      %p87 = scmp.eq.s32.totalorder %s86, 0
      %s89 = sadd.s32 %s88, 1
      %s90 = scalar_select %p87, %s88, %s89
      %p93 = pneg %p87
      %p94 = scmp.eq.s32.totalorder %s12, 1
      %p95 = por %p93, %p94
      %p96 = scmp.ne.s32.totalorder %s88, %s91
      %p97 = scmp.eq.s32.totalorder %s12, 0
      %p98 = por %p96, %p97
      %p99 = scmp.ne.s32.totalorder %s88, %s91
      %p100 = scmp.eq.s32.totalorder %s17, 1
      %p101 = por %p99, %p100
      %p102 = scmp.ne.s32.totalorder %s91, %s92
      %p103 = scmp.eq.s32.totalorder %s17, 0
      %p104 = por %p102, %p103
      %p105 = scmp.ne.s32.totalorder %s91, %s92
      %p106 = scmp.eq.s32.totalorder %s18, 1
      %p107 = por %p105, %p106
      %p109 = scmp.ne.s32.totalorder %s92, %s108
      %p110 = scmp.eq.s32.totalorder %s18, 0
      %p111 = por %p109, %p110
      %p112 = scmp.le.s32.totalorder 1, %s12
      %p113 = scmp.lt.s32.totalorder %s12, 3
      %p114 = pnand %p112, %p113
      %p115 = pneg %p114
      // Predicated region
      $region9: #{tpu_custom_call.1} parent=5 // pred_check
        _
      $region10: #{tpu_custom_call.1} parent=5 // pred_check_branch
        %117 = sbr.rel (%p114) target = $region12
      $region11: #{tpu_custom_call.1} parent=5 // pred_region
        %s118 = ssub.s32 %s12, 1
      $region12: #{tpu_custom_call.1} parent=5 // pred_fallthru
        _
      %p119 = scmp.lt.s32.totalorder %s12, 2
      // Predicated region
      $region13: #{tpu_custom_call.1} parent=5 // pred_check
        %p120 = pneg %p119
      $region14: #{tpu_custom_call.1} parent=5 // pred_check_branch
        %122 = sbr.rel (%p120) target = $region16
      $region15: #{tpu_custom_call.1} parent=5 // pred_region
        // Predicated region
        $region17: #{tpu_custom_call.1} parent=15 // pred_check
          %p123 = pneg %p46
        $region18: #{tpu_custom_call.1} parent=15 // pred_check_branch
          %125 = sbr.rel (%p123) target = $region20
        $region19: #{tpu_custom_call.1} parent=15 // pred_region
          %s126 = sand.u32 %s36, 1
          %s127 = scalar_lea.sflag [#allocation5], %s126
          %s128 = sand.u32 %s36, 1
          %s129 = smul.addr %s128, 128
          %s130 = scalar_lea.vmem [#allocation4], %s129
          %s131 = smul.u32 8, %s19
          %s132 = smul.u32 2, %s20
          %s134 = ssub.s32 2048, 2048
          %135 = vsyncadd %s127, %s134
          %s136 = smul.addr %s131, 2
          %s137 = sadd.s32 %s132, %s136
          %s138 = smul.addr %s137, 128
          %s139 = scalar_lea.hbm %s0, %s138
          %s140 = sshll.u32 %s130, 4
          %s141 = int_to_ptr.vmem [resolvable:$true] %s140
          %146 = dma.hbm_to_vmem [thread:$0]  %s139, 2048, %s141, %s127, 256, 256, 16
        $region20: #{tpu_custom_call.1} parent=15 // pred_fallthru
          _
      $region16: #{tpu_custom_call.1} parent=5 // pred_fallthru
        _
      %p147 = scmp.le.s32.totalorder 1, %s12
      %p148 = scmp.lt.s32.totalorder %s12, 3
      %p149 = pnand %p147, %p148
      %p150 = pneg %p149
      // Predicated region
      $region21: #{tpu_custom_call.1} parent=5 // pred_check
        _
      $region22: #{tpu_custom_call.1} parent=5 // pred_check_branch
        %152 = sbr.rel (%p149) target = $region24
      $region23: #{tpu_custom_call.1} parent=5 // pred_region
        %s153 = ssub.s32 %s12, 1
        %s154 = sand.u32 %s39, 1
        %s155 = scalar_lea.sflag [#allocation5], %s154
        %s156 = sand.u32 %s39, 1
        %s157 = smul.addr %s156, 128
        %s158 = scalar_lea.vmem [#allocation4], %s157
        // Predicated region
        $region25: #{tpu_custom_call.1} parent=23 // pred_check
          %p159 = pneg %p52
        $region26: #{tpu_custom_call.1} parent=23 // pred_check_branch
          %161 = sbr.rel (%p159) target = $region28
        $region27: #{tpu_custom_call.1} parent=23 // pred_region
          %162 = dma.done %s155, 2048
        $region28: #{tpu_custom_call.1} parent=23 // pred_fallthru
          _
        %s163 = sand.u32 %s39, 1
        %s164 = scalar_lea.sflag [#allocation5], %s163
        %s165 = sand.u32 %s39, 1
        %s166 = smul.addr %s165, 128
        %s167 = scalar_lea.vmem [#allocation4], %s166
        %p168 = pneg %p52
        %p169 = pneg %p49
        %p170 = pneg %p78
        %p171 = pneg %p75
        %s172 = smul.u32 8, %s21
        %p173 = scmp.lt.s32.totalorder %s172, 15
        %s174 = scalar_select %p173, %s172, 15
        %s175 = smul.addr %s174, 8
        %s176 = scalar_lea.vmem %s1, %s175
        %p177 = pneg %p104
        %p178 = pneg %p101
        %s179 = smul.u32 8, %s21
        %p180 = scmp.lt.s32.totalorder %s179, 15
        %s181 = scalar_select %p180, %s179, 15
        %s182 = smul.addr %s181, 8
        %s183 = scalar_lea.vmem %s2, %s182
        %s184 = smul.u32 8, %s21
        %s185 = smul.u32 2, %s22
        %s186 = smul.u32 8, %s21
        %p187 = scmp.lt.s32.totalorder %s186, 15
        %s188 = scalar_select %p187, %s186, 15
        %s189 = smul.addr %s188, 8
        %s190 = scalar_lea.vmem %s1, %s189
        %s191 = smul.u32 8, %s21
        %s192 = smul.u32 8, %s21
        %p193 = scmp.lt.s32.totalorder %s192, 15
        %s194 = scalar_select %p193, %s192, 15
        %s195 = smul.addr %s194, 8
        %s196 = scalar_lea.vmem %s2, %s195
        %s197 = smul.u32 8, %s21
        %p198 = scmp.eq.s32.totalorder %s22, 0
        // Predicated region
        $region29: #{tpu_custom_call.1} parent=23 // pred_check
          %p199 = pneg %p198
        $region30: #{tpu_custom_call.1} parent=23 // pred_check_branch
          %201 = sbr.rel (%p199) target = $region32
        $region31: #{tpu_custom_call.1} parent=23 // pred_region
          %202 = vst [vmem:[#allocation2] sm:$0xff] 0.0
          %203 = vst [vmem:[#allocation2 + $0x8] sm:$0xff] 0.0
          %204 = vst [vmem:[#allocation2 + $0x10] sm:$0xff] 0.0
          %205 = vst [vmem:[#allocation2 + $0x18] sm:$0xff] 0.0
          %206 = vst [vmem:[#allocation2 + $0x20] sm:$0xff] 0.0
          %207 = vst [vmem:[#allocation2 + $0x28] sm:$0xff] 0.0
          %208 = vst [vmem:[#allocation2 + $0x30] sm:$0xff] 0.0
          %209 = vst [vmem:[#allocation2 + $0x38] sm:$0xff] 0.0
          %210 = vst [vmem:[#allocation3] sm:$0xff] -inf
          %211 = vst [vmem:[#allocation3 + $0x8] sm:$0xff] -inf
          %212 = vst [vmem:[#allocation3 + $0x10] sm:$0xff] -inf
          %213 = vst [vmem:[#allocation3 + $0x18] sm:$0xff] -inf
          %214 = vst [vmem:[#allocation3 + $0x20] sm:$0xff] -inf
          %215 = vst [vmem:[#allocation3 + $0x28] sm:$0xff] -inf
          %216 = vst [vmem:[#allocation3 + $0x30] sm:$0xff] -inf
          %217 = vst [vmem:[#allocation3 + $0x38] sm:$0xff] -inf
          %v218 = vld [vmem:[%s158] sm:$0xff]
          %v219 = vld [vmem:[%s158 + $0x10] sm:$0xff]
          %v220 = vld [vmem:[%s158 + $0x20] sm:$0xff]
          %v221 = vld [vmem:[%s158 + $0x30] sm:$0xff]
          %v222 = vld [vmem:[%s158 + $0x40] sm:$0xff]
          %v223 = vld [vmem:[%s158 + $0x50] sm:$0xff]
          %v224 = vld [vmem:[%s158 + $0x60] sm:$0xff]
          %v225 = vld [vmem:[%s158 + $0x70] sm:$0xff]
          %v226 = vadd.f32 %v218, 0.0
          %v227 = vadd.f32 %v219, 0.0
          %v228 = vadd.f32 %v220, 0.0
          %v229 = vadd.f32 %v221, 0.0
          %v230 = vadd.f32 %v222, 0.0
          %v231 = vadd.f32 %v223, 0.0
          %v232 = vadd.f32 %v224, 0.0
          %v233 = vadd.f32 %v225, 0.0
          %v234 = vld [vmem:[%s158 + $0x8] sm:$0xff]
          %v235 = vld [vmem:[%s158 + $0x18] sm:$0xff]
          %v236 = vld [vmem:[%s158 + $0x28] sm:$0xff]
          %v237 = vld [vmem:[%s158 + $0x38] sm:$0xff]
          %v238 = vld [vmem:[%s158 + $0x48] sm:$0xff]
          %v239 = vld [vmem:[%s158 + $0x58] sm:$0xff]
          %v240 = vld [vmem:[%s158 + $0x68] sm:$0xff]
          %v241 = vld [vmem:[%s158 + $0x78] sm:$0xff]
          %v242 = vadd.f32 %v226, %v234
          %v243 = vadd.f32 %v227, %v235
          %v244 = vadd.f32 %v228, %v236
          %v245 = vadd.f32 %v229, %v237
          %v246 = vadd.f32 %v230, %v238
          %v247 = vadd.f32 %v231, %v239
          %v248 = vadd.f32 %v232, %v240
          %v249 = vadd.f32 %v233, %v241
          %v250 = vmax.f32 %v218, %v234
          %v251 = vmax.f32 %v219, %v235
          %v252 = vmax.f32 %v220, %v236
          %v253 = vmax.f32 %v221, %v237
          %v254 = vmax.f32 %v222, %v238
          %v255 = vmax.f32 %v223, %v239
          %v256 = vmax.f32 %v224, %v240
          %v257 = vmax.f32 %v225, %v241
          %v258 = vld [vmem:[#allocation2] sm:$0xff]
          %v259 = vld [vmem:[#allocation2 + $0x8] sm:$0xff]
          %v260 = vld [vmem:[#allocation2 + $0x10] sm:$0xff]
          %v261 = vld [vmem:[#allocation2 + $0x18] sm:$0xff]
          %v262 = vld [vmem:[#allocation2 + $0x20] sm:$0xff]
          %v263 = vld [vmem:[#allocation2 + $0x28] sm:$0xff]
          %v264 = vld [vmem:[#allocation2 + $0x30] sm:$0xff]
          %v265 = vld [vmem:[#allocation2 + $0x38] sm:$0xff]
          %v266 = vadd.f32 %v258, %v242
          %v267 = vadd.f32 %v259, %v243
          %v268 = vadd.f32 %v260, %v244
          %v269 = vadd.f32 %v261, %v245
          %v270 = vadd.f32 %v262, %v246
          %v271 = vadd.f32 %v263, %v247
          %v272 = vadd.f32 %v264, %v248
          %v273 = vadd.f32 %v265, %v249
          %274 = vst [vmem:[#allocation2] sm:$0xff] %v266
          %275 = vst [vmem:[#allocation2 + $0x8] sm:$0xff] %v267
          %276 = vst [vmem:[#allocation2 + $0x10] sm:$0xff] %v268
          %277 = vst [vmem:[#allocation2 + $0x18] sm:$0xff] %v269
          %278 = vst [vmem:[#allocation2 + $0x20] sm:$0xff] %v270
          %279 = vst [vmem:[#allocation2 + $0x28] sm:$0xff] %v271
          %280 = vst [vmem:[#allocation2 + $0x30] sm:$0xff] %v272
          %281 = vst [vmem:[#allocation2 + $0x38] sm:$0xff] %v273
          %v282 = vld [vmem:[#allocation3] sm:$0xff]
          %v283 = vld [vmem:[#allocation3 + $0x8] sm:$0xff]
          %v284 = vld [vmem:[#allocation3 + $0x10] sm:$0xff]
          %v285 = vld [vmem:[#allocation3 + $0x18] sm:$0xff]
          %v286 = vld [vmem:[#allocation3 + $0x20] sm:$0xff]
          %v287 = vld [vmem:[#allocation3 + $0x28] sm:$0xff]
          %v288 = vld [vmem:[#allocation3 + $0x30] sm:$0xff]
          %v289 = vld [vmem:[#allocation3 + $0x38] sm:$0xff]
          %v290 = vmax.f32 %v282, %v250
          %v291 = vmax.f32 %v283, %v251
          %v292 = vmax.f32 %v284, %v252
          %v293 = vmax.f32 %v285, %v253
          %v294 = vmax.f32 %v286, %v254
          %v295 = vmax.f32 %v287, %v255
          %v296 = vmax.f32 %v288, %v256
          %v297 = vmax.f32 %v289, %v257
          %298 = vst [vmem:[#allocation3] sm:$0xff] %v290
          %299 = vst [vmem:[#allocation3 + $0x8] sm:$0xff] %v291
          %300 = vst [vmem:[#allocation3 + $0x10] sm:$0xff] %v292
          %301 = vst [vmem:[#allocation3 + $0x18] sm:$0xff] %v293
          %302 = vst [vmem:[#allocation3 + $0x20] sm:$0xff] %v294
          %303 = vst [vmem:[#allocation3 + $0x28] sm:$0xff] %v295
          %304 = vst [vmem:[#allocation3 + $0x30] sm:$0xff] %v296
          %305 = vst [vmem:[#allocation3 + $0x38] sm:$0xff] %v297
          %v306 = vld [vmem:[#allocation2] sm:$0xff]
          %v307 = vld [vmem:[#allocation2 + $0x8] sm:$0xff]
          %v308 = vld [vmem:[#allocation2 + $0x10] sm:$0xff]
          %v309 = vld [vmem:[#allocation2 + $0x18] sm:$0xff]
          %v310 = vld [vmem:[#allocation2 + $0x20] sm:$0xff]
          %v311 = vld [vmem:[#allocation2 + $0x28] sm:$0xff]
          %v312 = vld [vmem:[#allocation2 + $0x30] sm:$0xff]
          %v313 = vld [vmem:[#allocation2 + $0x38] sm:$0xff]
          %314 = vadd.xlane.f32.xlu0 %v306
          %v315 = vpop.xlane.xlu0 %314
          %316 = vadd.xlane.f32.xlu0 %v307
          %v317 = vpop.xlane.xlu0 %316
          %318 = vadd.xlane.f32.xlu0 %v308
          %v319 = vpop.xlane.xlu0 %318
          %320 = vadd.xlane.f32.xlu0 %v309
          %v321 = vpop.xlane.xlu0 %320
          %322 = vadd.xlane.f32.xlu0 %v310
          %v323 = vpop.xlane.xlu0 %322
          %324 = vadd.xlane.f32.xlu0 %v311
          %v325 = vpop.xlane.xlu0 %324
          %326 = vadd.xlane.f32.xlu0 %v312
          %v327 = vpop.xlane.xlu0 %326
          %328 = vadd.xlane.f32.xlu0 %v313
          %v329 = vpop.xlane.xlu0 %328
          %v330 = vmul.f32 %v315, 0.00390625
          %v331 = vmul.f32 %v317, 0.00390625
          %v332 = vmul.f32 %v319, 0.00390625
          %v333 = vmul.f32 %v321, 0.00390625
          %v334 = vmul.f32 %v323, 0.00390625
          %v335 = vmul.f32 %v325, 0.00390625
          %v336 = vmul.f32 %v327, 0.00390625
          %v337 = vmul.f32 %v329, 0.00390625
          %vm338 = vcmask 7168
          %339 = vst.msk [vmem:[%s190] sm:$0xff] %vm338, %v330
          %340 = vst.msk [vmem:[%s190 + $0x8] sm:$0xff] %vm338, %v331
          %341 = vst.msk [vmem:[%s190 + $0x10] sm:$0xff] %vm338, %v332
          %342 = vst.msk [vmem:[%s190 + $0x18] sm:$0xff] %vm338, %v333
          %343 = vst.msk [vmem:[%s190 + $0x20] sm:$0xff] %vm338, %v334
          %344 = vst.msk [vmem:[%s190 + $0x28] sm:$0xff] %vm338, %v335
          %345 = vst.msk [vmem:[%s190 + $0x30] sm:$0xff] %vm338, %v336
          %346 = vst.msk [vmem:[%s190 + $0x38] sm:$0xff] %vm338, %v337
          %v347 = vld [vmem:[#allocation3] sm:$0xff]
          %v348 = vld [vmem:[#allocation3 + $0x8] sm:$0xff]
          %v349 = vld [vmem:[#allocation3 + $0x10] sm:$0xff]
          %v350 = vld [vmem:[#allocation3 + $0x18] sm:$0xff]
          %v351 = vld [vmem:[#allocation3 + $0x20] sm:$0xff]
          %v352 = vld [vmem:[#allocation3 + $0x28] sm:$0xff]
          %v353 = vld [vmem:[#allocation3 + $0x30] sm:$0xff]
          %v354 = vld [vmem:[#allocation3 + $0x38] sm:$0xff]
          %355 = vmax.xlane.f32.xlu0 %v347
          %v356 = vpop.xlane.xlu0 %355
          %357 = vmax.xlane.f32.xlu0 %v348
          %v358 = vpop.xlane.xlu0 %357
          %359 = vmax.xlane.f32.xlu0 %v349
          %v360 = vpop.xlane.xlu0 %359
          %361 = vmax.xlane.f32.xlu0 %v350
          %v362 = vpop.xlane.xlu0 %361
          %363 = vmax.xlane.f32.xlu0 %v351
          %v364 = vpop.xlane.xlu0 %363
          %365 = vmax.xlane.f32.xlu0 %v352
          %v366 = vpop.xlane.xlu0 %365
          %367 = vmax.xlane.f32.xlu0 %v353
          %v368 = vpop.xlane.xlu0 %367
          %369 = vmax.xlane.f32.xlu0 %v354
          %v370 = vpop.xlane.xlu0 %369
          %371 = vst.msk [vmem:[%s196] sm:$0xff] %vm338, %v356
          %372 = vst.msk [vmem:[%s196 + $0x8] sm:$0xff] %vm338, %v358
          %373 = vst.msk [vmem:[%s196 + $0x10] sm:$0xff] %vm338, %v360
          %374 = vst.msk [vmem:[%s196 + $0x18] sm:$0xff] %vm338, %v362
          %375 = vst.msk [vmem:[%s196 + $0x20] sm:$0xff] %vm338, %v364
          %376 = vst.msk [vmem:[%s196 + $0x28] sm:$0xff] %vm338, %v366
          %377 = vst.msk [vmem:[%s196 + $0x30] sm:$0xff] %vm338, %v368
          %378 = vst.msk [vmem:[%s196 + $0x38] sm:$0xff] %vm338, %v370
        $region32: #{tpu_custom_call.1} parent=23 // pred_fallthru
          _
        %s379 = smul.u32 8, %s21
        %p380 = scmp.lt.s32.totalorder %s379, 15
        %s381 = scalar_select %p380, %s379, 15
        %s382 = smul.addr %s381, 8
        %s383 = scalar_lea.vmem %s1, %s382
        %s384 = smul.u32 8, %s21
        %p385 = scmp.lt.s32.totalorder %s384, 15
        %s386 = scalar_select %p385, %s384, 15
        %s387 = smul.addr %s386, 8
        %s388 = scalar_lea.vmem %s2, %s387
        // Predicated region
        $region33: #{tpu_custom_call.1} parent=23 // pred_check
          %p389 = pneg %p75
        $region34: #{tpu_custom_call.1} parent=23 // pred_check_branch
          %391 = sbr.rel (%p389) target = $region36
        $region35: #{tpu_custom_call.1} parent=23 // pred_region
          %s392 = smul.u32 8, %s21
        $region36: #{tpu_custom_call.1} parent=23 // pred_fallthru
          _
        // Predicated region
        $region37: #{tpu_custom_call.1} parent=23 // pred_check
          %p393 = pneg %p101
        $region38: #{tpu_custom_call.1} parent=23 // pred_check_branch
          %395 = sbr.rel (%p393) target = $region40
        $region39: #{tpu_custom_call.1} parent=23 // pred_region
          %s396 = smul.u32 8, %s21
        $region40: #{tpu_custom_call.1} parent=23 // pred_fallthru
          _
      $region24: #{tpu_custom_call.1} parent=5 // pred_fallthru
        _
      %p397 = scmp.le.s32.totalorder 2, %s12
      // Predicated region
      $region41: #{tpu_custom_call.1} parent=5 // pred_check
        %p398 = pneg %p397
      $region42: #{tpu_custom_call.1} parent=5 // pred_check_branch
        %400 = sbr.rel (%p398) target = $region44
      $region43: #{tpu_custom_call.1} parent=5 // pred_region
        %s401 = ssub.s32 %s12, 2
        // Predicated region
        $region45: #{tpu_custom_call.1} parent=43 // pred_check
          %p402 = pneg %p81
        $region46: #{tpu_custom_call.1} parent=43 // pred_check_branch
          %404 = sbr.rel (%p402) target = $region48
        $region47: #{tpu_custom_call.1} parent=43 // pred_region
          %s405 = smul.u32 8, %s23
          %p406 = scmp.lt.s32.totalorder %s405, 15
          %s407 = scalar_select %p406, %s405, 15
          %s408 = smul.addr %s407, 8
          %s409 = scalar_lea.vmem %s1, %s408
        $region48: #{tpu_custom_call.1} parent=43 // pred_fallthru
          _
        // Predicated region
        $region49: #{tpu_custom_call.1} parent=43 // pred_check
          %p410 = pneg %p107
        $region50: #{tpu_custom_call.1} parent=43 // pred_check_branch
          %412 = sbr.rel (%p410) target = $region52
        $region51: #{tpu_custom_call.1} parent=43 // pred_region
          %s413 = smul.u32 8, %s23
          %p414 = scmp.lt.s32.totalorder %s413, 15
          %s415 = scalar_select %p414, %s413, 15
          %s416 = smul.addr %s415, 8
          %s417 = scalar_lea.vmem %s2, %s416
        $region52: #{tpu_custom_call.1} parent=43 // pred_fallthru
          _
      $region44: #{tpu_custom_call.1} parent=5 // pred_fallthru
        _
    $region6: #{tpu_custom_call.1} parent=1 // loop_footer
      %s16 = sadd.s32 1, %s12
    $region7: #{tpu_custom_call.1} parent=1 // loop_footer_branch
      %11 = sbr.rel target = $region3
    $region8: #{tpu_custom_call.1} parent=1 // loop_exit
      _
    %418 = vsyncpa [#allocation5], 1
    %s419 = scalar_lea.sflag [#allocation5], 1
    %420 = vsyncpa %s419, 1

</llo_original>
